<compile_context>
chip_gen: v6e
topology: v6e:2x2x1
jax: 0.10.0
libtpu: 0.0.40
codegen_flags: <defaults>
</compile_context>

<pallas_src>
import functools

import numpy as np
import jax
import jax.numpy as jnp
from jax import lax
from jax.experimental import pallas as pl
from jax.experimental.pallas import tpu as pltpu


MAX_TILE_A = 4096       # anchor-tile (lane) width
_BIG = np.float32(1.0e8)  # degenerate-coordinate sentinel (forces intersection = 0)


# --------------------------------------------------------------------------------------
# Anchor generation (parameter / glue setup, host-side numpy, deterministic)
# --------------------------------------------------------------------------------------
def generate_anchors(size_base, scales, ratios, feat_h, feat_w, stride):
    scales = np.asarray(scales, np.float32)
    ratios = np.asarray(ratios, np.float32)
    h_ratios = np.sqrt(ratios)
    w_ratios = 1.0 / h_ratios
    ws = (size_base * w_ratios[:, None] * scales[None, :]).reshape(-1)
    hs = (size_base * h_ratios[:, None] * scales[None, :]).reshape(-1)
    ctr = 0.5 * (size_base - 1.0)
    base = np.stack(
        [ctr - 0.5 * (ws - 1.0), ctr - 0.5 * (hs - 1.0),
         ctr + 0.5 * (ws - 1.0), ctr + 0.5 * (hs - 1.0)], axis=1)
    shift_x = np.arange(feat_w, dtype=np.float32) * stride
    shift_y = np.arange(feat_h, dtype=np.float32) * stride
    sx, sy = np.meshgrid(shift_x, shift_y)
    shifts = np.stack([sx.ravel(), sy.ravel(), sx.ravel(), sy.ravel()], axis=1)
    anchors = (shifts[:, None, :] + base[None, :, :]).reshape(-1, 4)
    return anchors.astype(np.float32)


# --------------------------------------------------------------------------------------
# Main (single-pass) kernel: labels, bbox targets, tile-local gt max + "realizes it" bits
# --------------------------------------------------------------------------------------
def rpn_target_kernel(anchors_ref, gt_ref, gmat_ref, bitw_ref, out_ref, tmax_ref, *,
                      neg_thr, pos_thr, n_bit_groups, use_approx_recip):
    # anchors_ref : (16, TILE_A) rows: 0..3 IoU coords (degenerate for invalid/pad anchors),
    #               4 area, 5 valid, 6 cx, 7 cy, 8 1/w, 9 1/h, 10 log w, 11 log h, 12..15 zero
    # gt_ref      : (1, G_pad, 8) cols: x1,y1,x2,y2 (degenerate for padded/1x1 gts), area, 0,0,0
    # gmat_ref    : (1, 8, G_pad) rows 0..3: bf16-representable part of [gcx,gcy,log gw,log gh],
    #               rows 4..7: f32 residual (hi + lo == exact f32 value)
    # bitw_ref    : (8, G_pad)    bitw[g // 8, g] = 2 ** (g % 8)
    # out_ref     : (1, 5 + ng, TILE_A) rows: label, tx, ty, tw, th, eq-bits per 8-gt group
    # tmax_ref    : (1, G_pad, 128)     tile-local per-gt max IoU (replicated over 128 lanes)
    ax1 = anchors_ref[0:1, :]
    ay1 = anchors_ref[1:2, :]
    ax2 = anchors_ref[2:3, :]
    ay2 = anchors_ref[3:4, :]
    a_area = anchors_ref[4:5, :]
    avalid = anchors_ref[5:6, :]
    acx = anchors_ref[6:7, :]
    acy = anchors_ref[7:8, :]
    inv_aw = anchors_ref[8:9, :]
    inv_ah = anchors_ref[9:10, :]
    log_aw = anchors_ref[10:11, :]
    log_ah = anchors_ref[11:12, :]

    gtb = gt_ref[0]                                   # (G_pad, 8)
    gx1 = gtb[:, 0:1]
    gy1 = gtb[:, 1:2]
    gx2 = gtb[:, 2:3]
    gy2 = gtb[:, 3:4]
    g_area = gtb[:, 4:5]

    # masked pairwise IoU via degenerate geometry (no per-element validity masking needed)
    iw = jnp.maximum(jnp.minimum(ax2, gx2) - jnp.maximum(ax1, gx1) + 1.0, 0.0)
    ih = jnp.maximum(jnp.minimum(ay2, gy2) - jnp.maximum(ay1, gy1) + 1.0, 0.0)
    inter = iw * ih
    union = a_area + g_area - inter                   # >= 1 by construction
    if use_approx_recip:
        ovl = inter * pl.reciprocal(union, approx=True)   # EUP slot, frees the VALU
    else:
        ovl = inter / union
    # (G_pad, TILE_A); exactly 0.0 for invalid anchors / padded / degenerate gt boxes

    g_pad = ovl.shape[0]

    # per-anchor best gt (max + first argmax)
    max_ovl = jnp.max(ovl, axis=0, keepdims=True)                         # (1, T)
    g_iota = lax.broadcasted_iota(jnp.int32, ovl.shape, 0)                # (G_pad, T)
    argmax_g = jnp.min(jnp.where(ovl == max_ovl, g_iota, g_pad),
                       axis=0, keepdims=True)                             # (1, T)

    # per-gt tile-local max IoU + bit-packed "this anchor realizes it" flags (MXU dot)
    tile_max = jnp.max(ovl, axis=1, keepdims=True)                        # (G_pad, 1)
    eqf = (ovl == tile_max).astype(jnp.float32)                           # (G_pad, T)
    bits = jnp.dot(bitw_ref[...], eqf, preferred_element_type=jnp.float32)  # (8, T), exact ints

    # labels: init -1, < neg -> 0, >= pos -> 1, dropped (outside-image / padding) -> -1.
    # The "anchor that realizes a gt's *global* best IoU" rule is applied outside the
    # kernel from `bits` + `tile_max` (exact and tie-preserving, same ordering as torch).
    label = jnp.where(max_ovl < neg_thr, 0.0, -1.0)
    label = jnp.where(max_ovl >= pos_thr, 1.0, label)
    label = jnp.where(avalid > 0.5, label, -1.0)

    # gather [gcx, gcy, log gw, log gh] of the argmax gt via one-hot MXU matmul.
    # rows 0..3 of gmat are exactly bf16-representable, rows 4..7 are the tiny f32
    # residual, so hi+lo recovers the exact f32 value at any MXU matmul precision.
    sel = (g_iota == argmax_g).astype(jnp.float32)                        # (G_pad, T)
    sg = jnp.dot(gmat_ref[0], sel, preferred_element_type=jnp.float32)    # (8, T)
    gcx = sg[0:1, :] + sg[4:5, :]
    gcy = sg[1:2, :] + sg[5:6, :]
    lgw = sg[2:3, :] + sg[6:7, :]
    lgh = sg[3:4, :] + sg[7:8, :]

    # encodeBboxes with precomputed anchor geometry (divides -> multiplies, logs -> subs);
    # vz zeroes the targets of dropped anchors (unmap fill = 0).
    vz = avalid
    tx = (gcx - acx) * inv_aw * vz
    ty = (gcy - acy) * inv_ah * vz
    tw = (lgw - log_aw) * vz
    th = (lgh - log_ah) * vz

    out_ref[0, :, :] = jnp.concatenate(
        [label, tx, ty, tw, th, bits[0:n_bit_groups, :]], axis=0)         # single packed store
    tmax_ref[0, :, :] = jnp.broadcast_to(tile_max, (g_pad, 128))


# --------------------------------------------------------------------------------------
# Wrapper (glue): anchor generation, padding, precompute, pallas_call, post-merge, levels
# --------------------------------------------------------------------------------------
def build_rpn_targets(gt_boxes, rpn_features_shapes, img_info, num_gt_boxes,
                      feature_strides, anchor_size_bases, anchor_scales, anchor_ratios,
                      neg_overlap=0.3, pos_overlap=0.7, fg_fraction=0.5,
                      rpn_batch_size=256, use_approx_iou_recip=True,
                      max_tile_a=MAX_TILE_A, channel_major_bbox=False):
    gt_boxes = jnp.asarray(gt_boxes, jnp.float32)
    B, G, _ = gt_boxes.shape

    # ---- anchors for every pyramid level (host-side, deterministic) ----
    anchors_levels = []
    for (fh, fw), size_base, stride in zip(rpn_features_shapes, anchor_size_bases, feature_strides):
        anchors_levels.append(
            generate_anchors(size_base, anchor_scales, anchor_ratios, fh, fw, stride))
    num_anchors_levels = [a.shape[0] for a in anchors_levels]
    anchors = np.concatenate(anchors_levels, axis=0).astype(np.float32)
    A = anchors.shape[0]

    # ---- tiling of the anchor (lane) axis ----
    A_128 = int(np.ceil(A / 128.0) * 128)
    tile_a = int(min(max_tile_a, A_128))
    num_tiles = int(np.ceil(A_128 / float(tile_a)))
    if B == 1 and num_tiles % 2 == 1 and A_128 > 128:
        # keep both v7x TensorCores busy when the batch axis offers no parallelism
        target = num_tiles + 1
        tile_a = int(np.ceil(A_128 / float(target) / 128.0) * 128)
        num_tiles = int(np.ceil(A_128 / float(tile_a)))
    A_pad = num_tiles * tile_a

    G_pad = int(max(8, int(np.ceil(G / 8.0) * 8)))
    ng = G_pad // 8
    assert ng <= 8, "more than 64 gt boxes per image not supported"
    # TODO(synk): add extra bit-weight rows (or a second bits output) for G_pad > 64.

    # ---- per-anchor geometry precompute (12 used sublane rows) ----
    # NOTE: faithful to the torch module, which clips *every* batch element against
    # img_info[0] (int(img_info[0][0]) / int(img_info[0][1])).
    img_h = float(int(img_info[0][0]))
    img_w = float(int(img_info[0][1]))

    apad = np.zeros((A_pad, 4), np.float32)
    apad[:A] = anchors
    x1, y1, x2, y2 = apad[:, 0], apad[:, 1], apad[:, 2], apad[:, 3]
    inside = (x1 >= 0.0) & (y1 >= 0.0) & (x2 < img_w) & (y2 < img_h)
    real = np.arange(A_pad) < A
    valid = inside & real
    aw = (x2 - x1 + np.float32(1.0)).astype(np.float32)
    ah = (y2 - y1 + np.float32(1.0)).astype(np.float32)

    anchors_t = np.zeros((16, A_pad), np.float32)
    # IoU rows: degenerate coords for invalid / padding anchors -> intersection == 0 exactly
    anchors_t[0] = np.where(valid, x1, _BIG)
    anchors_t[1] = np.where(valid, y1, _BIG)
    anchors_t[2] = np.where(valid, x2, -_BIG)
    anchors_t[3] = np.where(valid, y2, -_BIG)
    anchors_t[4] = np.where(valid, aw * ah, np.float32(1.0))
    anchors_t[5] = valid.astype(np.float32)
    # geometry rows from the *original* coords (always finite; vz zeroes dropped anchors)
    anchors_t[6] = x1 + np.float32(0.5) * aw
    anchors_t[7] = y1 + np.float32(0.5) * ah
    anchors_t[8] = np.float32(1.0) / aw
    anchors_t[9] = np.float32(1.0) / ah
    anchors_t[10] = np.log(aw)
    anchors_t[11] = np.log(ah)
    anchors_t = jnp.asarray(anchors_t)

    # ---- per-gt precompute (tiny) ----
    # Zeroing rows >= num_gt_boxes is a no-op for zero-padded gt (torch semantics kept)
    # but makes padding robust if callers leave garbage there.
    num_gt = jnp.asarray(num_gt_boxes, jnp.int32).reshape(B)
    keep_gt = (jnp.arange(G)[None, :] < num_gt[:, None]).astype(jnp.float32)
    gtc = gt_boxes[..., :4] * keep_gt[:, :, None]
    gt_pad = jnp.zeros((B, G_pad, 4), jnp.float32).at[:, :G, :].set(gtc)
    gx1, gy1, gx2, gy2 = gt_pad[..., 0], gt_pad[..., 1], gt_pad[..., 2], gt_pad[..., 3]
    gw = gx2 - gx1 + 1.0
    gh = gy2 - gy1 + 1.0
    g_ok = jnp.logical_not((gw == 1.0) & (gh == 1.0))      # torch ignores 1x1 / padded boxes
    big = jnp.float32(_BIG)
    zeros_g = jnp.zeros_like(gx1)
    gt_t = jnp.stack(
        [jnp.where(g_ok, gx1, big), jnp.where(g_ok, gy1, big),
         jnp.where(g_ok, gx2, -big), jnp.where(g_ok, gy2, -big),
         jnp.where(g_ok, gw * gh, 1.0), zeros_g, zeros_g, zeros_g], axis=2)      # (B, G_pad, 8)

    gcx = gx1 + 0.5 * gw
    gcy = gy1 + 0.5 * gh
    gmat_full = jnp.stack([gcx, gcy, jnp.log(gw), jnp.log(gh)], axis=1)          # (B, 4, G_pad)
    gmat_hi = gmat_full.astype(jnp.bfloat16).astype(jnp.float32)
    gmat_t = jnp.concatenate([gmat_hi, gmat_full - gmat_hi], axis=1)             # (B, 8, G_pad)

    bitw = np.zeros((8, G_pad), np.float32)
    for g in range(G_pad):
        bitw[g // 8, g] = float(1 << (g % 8))
    bitw = jnp.asarray(bitw)

    # ---- single fused pallas_call ----
    out_rows = 5 + ng
    kernel = functools.partial(
        rpn_target_kernel, neg_thr=float(neg_overlap), pos_thr=float(pos_overlap),
        n_bit_groups=ng, use_approx_recip=bool(use_approx_iou_recip))

    out, tmax = pl.pallas_call(
        kernel,
        out_shape=(jax.ShapeDtypeStruct((B, out_rows, A_pad), jnp.float32),
                   jax.ShapeDtypeStruct((B, G_pad, num_tiles * 128), jnp.float32)),
        grid=(num_tiles, B),
        in_specs=[
            pl.BlockSpec((16, tile_a), lambda a, b: (0, a)),        # anchor tile (resident over inner b)
            pl.BlockSpec((1, G_pad, 8), lambda a, b: (b, 0, 0)),    # gt IoU table (tiny)
            pl.BlockSpec((1, 8, G_pad), lambda a, b: (b, 0, 0)),    # gather matrix hi/lo (tiny)
            pl.BlockSpec((8, G_pad), lambda a, b: (0, 0)),          # bit weights (grid-constant)
        ],
        out_specs=(pl.BlockSpec((1, out_rows, tile_a), lambda a, b: (b, 0, a)),
                   pl.BlockSpec((1, G_pad, 128), lambda a, b: (b, 0, a))),
        compiler_params=pltpu.CompilerParams(
            dimension_semantics=("parallel", "parallel")),
    )(anchors_t, gt_t, gmat_t, bitw)

    # ---- "anchors that realize each gt's global best IoU" -> label 1 (exact, ties kept) ----
    tmax_v = tmax.reshape(B, G_pad, num_tiles, 128)[:, :, :, 0]           # (B, G_pad, num_tiles)
    gt_max = jnp.max(tmax_v, axis=2)                                      # (B, G_pad)
    host = (tmax_v == gt_max[:, :, None]) & (gt_max[:, :, None] > 0.0)    # (B, G_pad, num_tiles)
    gbit = jnp.asarray((2 ** (np.arange(G_pad) % 8)).astype(np.int32))    # (G_pad,)
    host_bits = (host.astype(jnp.int32) * gbit[None, :, None]).reshape(
        B, ng, 8, num_tiles).sum(axis=2)                                  # (B, ng, num_tiles)

    labels_k = out[:, 0, :].reshape(B, num_tiles, tile_a)
    bits_i = out[:, 5:5 + ng, :].astype(jnp.int32).reshape(B, ng, num_tiles, tile_a)
    hit = jnp.any((bits_i & host_bits[:, :, :, None]) != 0, axis=1)       # (B, num_tiles, tile_a)
    labels = jnp.where(hit, 1.0, labels_k).reshape(B, A_pad)[:, :A]       # (B, A)

    bbox_cm = out[:, 1:5, :A]                                             # (B, 4, A) channel-major

    # TODO(synk): the torch fg/bg random sub-sampling (np.random.permutation over dynamic
    # torch.nonzero index sets) has no clean Pallas equivalent; with
    # rpn_batch_size >= number of labeled anchors it is provably a no-op, so it is skipped.

    labels_levels, bbox_targets_levels, pointer = [], [], 0
    if channel_major_bbox:
        bbox_all = bbox_cm                                                # (B, 4, A), no relayout
    else:
        bbox_all = jnp.transpose(bbox_cm, (0, 2, 1))                      # (B, A, 4) torch layout
    for n in num_anchors_levels:
        labels_levels.append(labels[:, pointer:pointer + n])
        if channel_major_bbox:
            bbox_targets_levels.append(bbox_all[:, :, pointer:pointer + n])
        else:
            bbox_targets_levels.append(bbox_all[:, pointer:pointer + n, :])
        pointer += n
    return [labels_levels, bbox_targets_levels], anchors, num_anchors_levels


# --------------------------------------------------------------------------------------
# Pure-numpy reference (mirrors the PyTorch forward) for a correctness check
# --------------------------------------------------------------------------------------
def numpy_reference(anchors, gt_boxes, img_info, neg, pos):
    anchors = anchors.astype(np.float32)
    gt = np.asarray(gt_boxes, np.float32)
    B, Gn, _ = gt.shape
    A = anchors.shape[0]
    img_h, img_w = int(img_info[0][0]), int(img_info[0][1])
    neg = np.float32(neg)
    pos = np.float32(pos)

    keep = np.where((anchors[:, 0] >= 0) & (anchors[:, 1] >= 0) &
                    (anchors[:, 2] < img_w) & (anchors[:, 3] < img_h))[0]
    anc = anchors[keep]
    K = anc.shape[0]

    aw = anc[:, 2] - anc[:, 0] + 1.0
    ah = anc[:, 3] - anc[:, 1] + 1.0
    a_area = aw * ah
    gw = gt[:, :, 2] - gt[:, :, 0] + 1.0
    gh = gt[:, :, 3] - gt[:, :, 1] + 1.0
    g_area = gw * gh

    iw = (np.minimum(anc[None, :, None, 2], gt[:, None, :, 2]) -
          np.maximum(anc[None, :, None, 0], gt[:, None, :, 0]) + 1.0)
    ih = (np.minimum(anc[None, :, None, 3], gt[:, None, :, 3]) -
          np.maximum(anc[None, :, None, 1], gt[:, None, :, 1]) + 1.0)
    iw = np.maximum(iw, 0.0)
    ih = np.maximum(ih, 0.0)
    inter = (iw * ih).astype(np.float32)
    ovl = inter / (a_area[None, :, None] + g_area[:, None, :] - inter)
    gt_zero = ((gw == 1.0) & (gh == 1.0))[:, None, :]
    ovl = np.where(gt_zero, np.float32(0.0), ovl).astype(np.float32)

    max_ovl = ovl.max(axis=2)
    argmax = ovl.argmax(axis=2)
    gt_max = ovl.max(axis=1)

    labels = np.full((B, K), -1.0, np.float32)
    labels[max_ovl < neg] = 0.0
    gt_max = np.where(gt_max == 0.0, np.float32(1e-5), gt_max).astype(np.float32)
    eq_cnt = (ovl == gt_max[:, None, :]).sum(axis=2)
    labels[eq_cnt > 0] = 1.0
    labels[max_ovl >= pos] = 1.0

    gt_rois = np.take_along_axis(gt[:, :, :4], argmax[:, :, None], axis=1)
    acx = anc[:, 0] + 0.5 * aw
    acy = anc[:, 1] + 0.5 * ah
    sgw = gt_rois[:, :, 2] - gt_rois[:, :, 0] + 1.0
    sgh = gt_rois[:, :, 3] - gt_rois[:, :, 1] + 1.0
    gcx = gt_rois[:, :, 0] + 0.5 * sgw
    gcy = gt_rois[:, :, 1] + 0.5 * sgh
    tx = (gcx - acx[None, :]) / aw[None, :]
    ty = (gcy - acy[None, :]) / ah[None, :]
    tw = np.log(sgw / aw[None, :])
    th = np.log(sgh / ah[None, :])
    bt = np.stack([tx, ty, tw, th], axis=2).astype(np.float32)

    labels_full = np.full((B, A), -1.0, np.float32)
    labels_full[:, keep] = labels
    bt_full = np.zeros((B, A, 4), np.float32)
    bt_full[:, keep, :] = bt
    return labels_full, bt_full


# --------------------------------------------------------------------------------------
if __name__ == "__main__":
    key = jax.random.PRNGKey(0)
    B, G = 2, 4
    feature_strides = [8, 16]
    anchor_size_bases = [32.0, 64.0]
    anchor_scales = [1.0]
    anchor_ratios = [0.5, 1.0, 2.0]
    rpn_features_shapes = [(8, 8), (4, 4)]    # (H, W) per pyramid level
    img_h = img_w = 64
    img_info = np.array([[img_h, img_w, 1.0]] * B, np.float32)

    k1, k2, k3, k4 = jax.random.split(key, 4)
    x1 = jax.random.uniform(k1, (B, G), minval=0.0, maxval=28.0)
    y1 = jax.random.uniform(k2, (B, G), minval=0.0, maxval=28.0)
    bw = jax.random.uniform(k3, (B, G), minval=12.0, maxval=34.0)
    bh = jax.random.uniform(k4, (B, G), minval=12.0, maxval=34.0)
    x2 = jnp.minimum(x1 + bw, img_w - 1.0)
    y2 = jnp.minimum(y1 + bh, img_h - 1.0)
    cls = jnp.ones((B, G), jnp.float32)
    gt_boxes = jnp.stack([x1, y1, x2, y2, cls], axis=2)
    num_gt_boxes = jnp.array([G, G], jnp.int32)   # unused by the torch forward; masks padding only

    # exact-IoU run, checked against a numpy mirror of the torch forward
    (labels_levels, bbox_levels), anchors_np, num_anchors_levels = build_rpn_targets(
        gt_boxes, rpn_features_shapes, img_info, num_gt_boxes,
        feature_strides, anchor_size_bases, anchor_scales, anchor_ratios,
        neg_overlap=0.3, pos_overlap=0.7, fg_fraction=0.5, rpn_batch_size=256,
        use_approx_iou_recip=False)

    labels_levels = [jax.block_until_ready(l) for l in labels_levels]
    bbox_levels = [jax.block_until_ready(b) for b in bbox_levels]

    labels_full = np.concatenate([np.asarray(l) for l in labels_levels], axis=1)
    bbox_full = np.concatenate([np.asarray(b) for b in bbox_levels], axis=1)

    ref_labels, ref_bbox = numpy_reference(anchors_np, np.asarray(gt_boxes), img_info, 0.3, 0.7)

    total_anchors = anchors_np.shape[0]
    assert labels_full.shape == (B, total_anchors)
    assert bbox_full.shape == (B, total_anchors, 4)
    assert sum(num_anchors_levels) == total_anchors
    np.testing.assert_allclose(labels_full, ref_labels, atol=1e-6)
    np.testing.assert_allclose(bbox_full, ref_bbox, rtol=2e-4, atol=2e-4)

    # default fast path (EUP approximate reciprocal): make sure it compiles and runs
    (labels_fast, bbox_fast), _, _ = build_rpn_targets(
        gt_boxes, rpn_features_shapes, img_info, num_gt_boxes,
        feature_strides, anchor_size_bases, anchor_scales, anchor_ratios)
    _ = [jax.block_until_ready(l) for l in labels_fast]
    _ = [jax.block_until_ready(b) for b in bbox_fast]

    print("KERNEL_OK")
</pallas_src>

<mosaic_0001>
module attributes {stable_mosaic.version = 11 : i64} {
  func.func @rpn_target_kernel(%arg0: i32, %arg1: i32, %arg2: memref<16x256xf32, #tpu.memory_space<vmem>>, %arg3: memref<1x8x8xf32, #tpu.memory_space<vmem>>, %arg4: memref<1x8x8xf32, #tpu.memory_space<vmem>>, %arg5: memref<8x8xf32, #tpu.memory_space<vmem>>, %arg6: memref<1x6x256xf32, #tpu.memory_space<vmem>>, %arg7: memref<1x8x128xf32, #tpu.memory_space<vmem>>) attributes {dimension_semantics = [#tpu.dimension_semantics<parallel>, #tpu.dimension_semantics<parallel>], iteration_bounds = array<i64: 1, 2>, scalar_prefetch = 0 : i64, scratch_operands = 0 : i64, tpu.core_type = #tpu.core_type<tc>, window_params = [{transform_indices = @transform_0, window_bounds = array<i64: 16, 256>}, {transform_indices = @transform_1, window_bounds = array<i64: 1, 8, 8>}, {transform_indices = @transform_2, window_bounds = array<i64: 1, 8, 8>}, {pipeline_mode = #tpu.pipeline_mode<synchronous>, transform_indices = @transform_3, window_bounds = array<i64: 8, 8>}, {transform_indices = @transform_4, window_bounds = array<i64: 1, 6, 256>}, {transform_indices = @transform_5, window_bounds = array<i64: 1, 8, 128>}]} {
    %c0 = arith.constant 0 : index
    %c0_0 = arith.constant 0 : index
    %0 = vector.load %arg2[%c0, %c0_0] : memref<16x256xf32, #tpu.memory_space<vmem>>, vector<1x256xf32>
    %c1 = arith.constant 1 : index
    %c0_1 = arith.constant 0 : index
    %1 = vector.load %arg2[%c1, %c0_1] : memref<16x256xf32, #tpu.memory_space<vmem>>, vector<1x256xf32>
    %c2 = arith.constant 2 : index
    %c0_2 = arith.constant 0 : index
    %2 = vector.load %arg2[%c2, %c0_2] : memref<16x256xf32, #tpu.memory_space<vmem>>, vector<1x256xf32>
    %c3 = arith.constant 3 : index
    %c0_3 = arith.constant 0 : index
    %3 = vector.load %arg2[%c3, %c0_3] : memref<16x256xf32, #tpu.memory_space<vmem>>, vector<1x256xf32>
    %c4 = arith.constant 4 : index
    %c0_4 = arith.constant 0 : index
    %4 = vector.load %arg2[%c4, %c0_4] : memref<16x256xf32, #tpu.memory_space<vmem>>, vector<1x256xf32>
    %c5 = arith.constant 5 : index
    %c0_5 = arith.constant 0 : index
    %5 = vector.load %arg2[%c5, %c0_5] : memref<16x256xf32, #tpu.memory_space<vmem>>, vector<1x256xf32>
    %c6 = arith.constant 6 : index
    %c0_6 = arith.constant 0 : index
    %6 = vector.load %arg2[%c6, %c0_6] : memref<16x256xf32, #tpu.memory_space<vmem>>, vector<1x256xf32>
    %c7 = arith.constant 7 : index
    %c0_7 = arith.constant 0 : index
    %7 = vector.load %arg2[%c7, %c0_7] : memref<16x256xf32, #tpu.memory_space<vmem>>, vector<1x256xf32>
    %c8 = arith.constant 8 : index
    %c0_8 = arith.constant 0 : index
    %8 = vector.load %arg2[%c8, %c0_8] : memref<16x256xf32, #tpu.memory_space<vmem>>, vector<1x256xf32>
    %c9 = arith.constant 9 : index
    %c0_9 = arith.constant 0 : index
    %9 = vector.load %arg2[%c9, %c0_9] : memref<16x256xf32, #tpu.memory_space<vmem>>, vector<1x256xf32>
    %c10 = arith.constant 10 : index
    %c0_10 = arith.constant 0 : index
    %10 = vector.load %arg2[%c10, %c0_10] : memref<16x256xf32, #tpu.memory_space<vmem>>, vector<1x256xf32>
    %c11 = arith.constant 11 : index
    %c0_11 = arith.constant 0 : index
    %11 = vector.load %arg2[%c11, %c0_11] : memref<16x256xf32, #tpu.memory_space<vmem>>, vector<1x256xf32>
    %c0_12 = arith.constant 0 : index
    %c0_13 = arith.constant 0 : index
    %c0_14 = arith.constant 0 : index
    %12 = vector.load %arg3[%c0_12, %c0_13, %c0_14] : memref<1x8x8xf32, #tpu.memory_space<vmem>>, vector<1x8x8xf32>
    %13 = vector.shape_cast %12 : vector<1x8x8xf32> to vector<8x8xf32>
    %14 = vector.extract_strided_slice %13 {offsets = [0, 0], sizes = [8, 1], strides = [1, 1]} : vector<8x8xf32> to vector<8x1xf32>
    %15 = vector.extract_strided_slice %13 {offsets = [0, 1], sizes = [8, 1], strides = [1, 1]} : vector<8x8xf32> to vector<8x1xf32>
    %16 = vector.extract_strided_slice %13 {offsets = [0, 2], sizes = [8, 1], strides = [1, 1]} : vector<8x8xf32> to vector<8x1xf32>
    %17 = vector.extract_strided_slice %13 {offsets = [0, 3], sizes = [8, 1], strides = [1, 1]} : vector<8x8xf32> to vector<8x1xf32>
    %18 = vector.extract_strided_slice %13 {offsets = [0, 4], sizes = [8, 1], strides = [1, 1]} : vector<8x8xf32> to vector<8x1xf32>
    %19 = vector.broadcast %2 : vector<1x256xf32> to vector<8x256xf32>
    %20 = vector.broadcast %16 : vector<8x1xf32> to vector<8x256xf32>
    %21 = arith.minimumf %19, %20 : vector<8x256xf32>
    %22 = vector.broadcast %0 : vector<1x256xf32> to vector<8x256xf32>
    %23 = vector.broadcast %14 : vector<8x1xf32> to vector<8x256xf32>
    %24 = arith.maximumf %22, %23 : vector<8x256xf32>
    %25 = arith.subf %21, %24 : vector<8x256xf32>
    %cst = arith.constant 1.000000e+00 : f32
    %26 = vector.broadcast %cst : f32 to vector<8x256xf32>
    %27 = arith.addf %25, %26 : vector<8x256xf32>
    %cst_15 = arith.constant 0.000000e+00 : f32
    %28 = vector.broadcast %cst_15 : f32 to vector<8x256xf32>
    %29 = arith.maximumf %27, %28 : vector<8x256xf32>
    %30 = vector.broadcast %3 : vector<1x256xf32> to vector<8x256xf32>
    %31 = vector.broadcast %17 : vector<8x1xf32> to vector<8x256xf32>
    %32 = arith.minimumf %30, %31 : vector<8x256xf32>
    %33 = vector.broadcast %1 : vector<1x256xf32> to vector<8x256xf32>
    %34 = vector.broadcast %15 : vector<8x1xf32> to vector<8x256xf32>
    %35 = arith.maximumf %33, %34 : vector<8x256xf32>
    %36 = arith.subf %32, %35 : vector<8x256xf32>
    %cst_16 = arith.constant 1.000000e+00 : f32
    %37 = vector.broadcast %cst_16 : f32 to vector<8x256xf32>
    %38 = arith.addf %36, %37 : vector<8x256xf32>
    %cst_17 = arith.constant 0.000000e+00 : f32
    %39 = vector.broadcast %cst_17 : f32 to vector<8x256xf32>
    %40 = arith.maximumf %38, %39 : vector<8x256xf32>
    %41 = arith.mulf %29, %40 : vector<8x256xf32>
    %42 = vector.broadcast %4 : vector<1x256xf32> to vector<8x256xf32>
    %43 = vector.broadcast %18 : vector<8x1xf32> to vector<8x256xf32>
    %44 = arith.addf %42, %43 : vector<8x256xf32>
    %45 = arith.subf %44, %41 : vector<8x256xf32>
    %46 = arith.divf %41, %45 : vector<8x256xf32>
    %cst_18 = arith.constant dense<0xFF800000> : vector<256xf32>
    %47 = vector.multi_reduction <maximumf>, %46, %cst_18 [0] : vector<8x256xf32> to vector<256xf32>
    %48 = vector.shape_cast %47 : vector<256xf32> to vector<1x256xf32>
    %49 = tpu.iota {dimensions = array<i32: 0>} : vector<8x256xi32>
    %50 = vector.broadcast %48 : vector<1x256xf32> to vector<8x256xf32>
    %51 = arith.cmpf oeq, %46, %50 : vector<8x256xf32>
    %c8_i32 = arith.constant 8 : i32
    %52 = vector.broadcast %c8_i32 : i32 to vector<8x256xi32>
    %53 = arith.select %51, %49, %52 : vector<8x256xi1>, vector<8x256xi32>
    %cst_19 = arith.constant dense<2147483647> : vector<256xi32>
    %54 = vector.multi_reduction <minsi>, %53, %cst_19 [0] : vector<8x256xi32> to vector<256xi32>
    %55 = vector.shape_cast %54 : vector<256xi32> to vector<1x256xi32>
    %cst_20 = arith.constant dense<0xFF800000> : vector<8xf32>
    %56 = vector.multi_reduction <maximumf>, %46, %cst_20 [1] : vector<8x256xf32> to vector<8xf32>
    %57 = vector.shape_cast %56 : vector<8xf32> to vector<8x1xf32>
    %58 = vector.broadcast %57 : vector<8x1xf32> to vector<8x256xf32>
    %59 = arith.cmpf oeq, %46, %58 : vector<8x256xf32>
    %60 = arith.extui %59 : vector<8x256xi1> to vector<8x256xi32>
    %61 = arith.sitofp %60 : vector<8x256xi32> to vector<8x256xf32>
    %c0_21 = arith.constant 0 : index
    %c0_22 = arith.constant 0 : index
    %62 = vector.load %arg5[%c0_21, %c0_22] : memref<8x8xf32, #tpu.memory_space<vmem>>, vector<8x8xf32>
    %cst_23 = arith.constant dense<0.000000e+00> : vector<8x256xf32>
    %63 = tpu.matmul %62, %61, %cst_23 {dimension_numbers = #tpu.dot_dimension_numbers<[1], [0], [0], [1], [0, 0, 1, 1], [], []>} : vector<8x8xf32>, vector<8x256xf32>, vector<8x256xf32> -> vector<8x256xf32>
    %cst_24 = arith.constant 3.000000e-01 : f32
    %64 = vector.broadcast %cst_24 : f32 to vector<1x256xf32>
    %65 = arith.cmpf olt, %48, %64 : vector<1x256xf32>
    %cst_25 = arith.constant 0.000000e+00 : f32
    %cst_26 = arith.constant -1.000000e+00 : f32
    %66 = vector.broadcast %cst_25 : f32 to vector<1x256xf32>
    %67 = vector.broadcast %cst_26 : f32 to vector<1x256xf32>
    %68 = arith.select %65, %66, %67 : vector<1x256xi1>, vector<1x256xf32>
    %cst_27 = arith.constant 0.699999988 : f32
    %69 = vector.broadcast %cst_27 : f32 to vector<1x256xf32>
    %70 = arith.cmpf oge, %48, %69 : vector<1x256xf32>
    %cst_28 = arith.constant 1.000000e+00 : f32
    %71 = vector.broadcast %cst_28 : f32 to vector<1x256xf32>
    %72 = arith.select %70, %71, %68 : vector<1x256xi1>, vector<1x256xf32>
    %cst_29 = arith.constant 5.000000e-01 : f32
    %73 = vector.broadcast %cst_29 : f32 to vector<1x256xf32>
    %74 = arith.cmpf ogt, %5, %73 : vector<1x256xf32>
    %cst_30 = arith.constant -1.000000e+00 : f32
    %75 = vector.broadcast %cst_30 : f32 to vector<1x256xf32>
    %76 = arith.select %74, %72, %75 : vector<1x256xi1>, vector<1x256xf32>
    %77 = vector.broadcast %55 : vector<1x256xi32> to vector<8x256xi32>
    %78 = arith.cmpi eq, %49, %77 : vector<8x256xi32>
    %79 = arith.extui %78 : vector<8x256xi1> to vector<8x256xi32>
    %80 = arith.sitofp %79 : vector<8x256xi32> to vector<8x256xf32>
    %c0_31 = arith.constant 0 : index
    %c0_32 = arith.constant 0 : index
    %c0_33 = arith.constant 0 : index
    %81 = vector.load %arg4[%c0_31, %c0_32, %c0_33] : memref<1x8x8xf32, #tpu.memory_space<vmem>>, vector<1x8x8xf32>
    %82 = vector.shape_cast %81 : vector<1x8x8xf32> to vector<8x8xf32>
    %cst_34 = arith.constant dense<0.000000e+00> : vector<8x256xf32>
    %83 = tpu.matmul %82, %80, %cst_34 {dimension_numbers = #tpu.dot_dimension_numbers<[1], [0], [0], [1], [0, 0, 1, 1], [], []>} : vector<8x8xf32>, vector<8x256xf32>, vector<8x256xf32> -> vector<8x256xf32>
    %84 = vector.extract_strided_slice %83 {offsets = [0, 0], sizes = [1, 256], strides = [1, 1]} : vector<8x256xf32> to vector<1x256xf32>
    %85 = vector.extract_strided_slice %83 {offsets = [4, 0], sizes = [1, 256], strides = [1, 1]} : vector<8x256xf32> to vector<1x256xf32>
    %86 = arith.addf %84, %85 : vector<1x256xf32>
    %87 = vector.extract_strided_slice %83 {offsets = [1, 0], sizes = [1, 256], strides = [1, 1]} : vector<8x256xf32> to vector<1x256xf32>
    %88 = vector.extract_strided_slice %83 {offsets = [5, 0], sizes = [1, 256], strides = [1, 1]} : vector<8x256xf32> to vector<1x256xf32>
    %89 = arith.addf %87, %88 : vector<1x256xf32>
    %90 = vector.extract_strided_slice %83 {offsets = [2, 0], sizes = [1, 256], strides = [1, 1]} : vector<8x256xf32> to vector<1x256xf32>
    %91 = vector.extract_strided_slice %83 {offsets = [6, 0], sizes = [1, 256], strides = [1, 1]} : vector<8x256xf32> to vector<1x256xf32>
    %92 = arith.addf %90, %91 : vector<1x256xf32>
    %93 = vector.extract_strided_slice %83 {offsets = [3, 0], sizes = [1, 256], strides = [1, 1]} : vector<8x256xf32> to vector<1x256xf32>
    %94 = vector.extract_strided_slice %83 {offsets = [7, 0], sizes = [1, 256], strides = [1, 1]} : vector<8x256xf32> to vector<1x256xf32>
    %95 = arith.addf %93, %94 : vector<1x256xf32>
    %96 = arith.subf %86, %6 : vector<1x256xf32>
    %97 = arith.mulf %96, %8 : vector<1x256xf32>
    %98 = arith.mulf %97, %5 : vector<1x256xf32>
    %99 = arith.subf %89, %7 : vector<1x256xf32>
    %100 = arith.mulf %99, %9 : vector<1x256xf32>
    %101 = arith.mulf %100, %5 : vector<1x256xf32>
    %102 = arith.subf %92, %10 : vector<1x256xf32>
    %103 = arith.mulf %102, %5 : vector<1x256xf32>
    %104 = arith.subf %95, %11 : vector<1x256xf32>
    %105 = arith.mulf %104, %5 : vector<1x256xf32>
    %106 = vector.extract_strided_slice %63 {offsets = [0, 0], sizes = [1, 256], strides = [1, 1]} : vector<8x256xf32> to vector<1x256xf32>
    %107 = tpu.concatenate %76, %98, %101, %103, %105, %106 in 0 : vector<1x256xf32>, vector<1x256xf32>, vector<1x256xf32>, vector<1x256xf32>, vector<1x256xf32>, vector<1x256xf32> -> vector<6x256xf32>
    %c0_35 = arith.constant 0 : index
    %c0_36 = arith.constant 0 : index
    %c0_37 = arith.constant 0 : index
    %108 = vector.load %arg6[%c0_35, %c0_36, %c0_37] : memref<1x6x256xf32, #tpu.memory_space<vmem>>, vector<1x6x256xf32>
    %109 = vector.shape_cast %108 : vector<1x6x256xf32> to vector<6x256xf32>
    %110 = vector.shape_cast %107 : vector<6x256xf32> to vector<1x6x256xf32>
    tpu.vector_store %arg6[%c0_35, %c0_36, %c0_37], %110 {strides = array<i32>} : memref<1x6x256xf32, #tpu.memory_space<vmem>>, vector<1x6x256xf32>,
    %111 = vector.shape_cast %57 : vector<8x1xf32> to vector<8x1xf32>
    %112 = vector.broadcast %111 : vector<8x1xf32> to vector<8x128xf32>
    %c0_38 = arith.constant 0 : index
    %c0_39 = arith.constant 0 : index
    %c0_40 = arith.constant 0 : index
    %113 = vector.load %arg7[%c0_38, %c0_39, %c0_40] : memref<1x8x128xf32, #tpu.memory_space<vmem>>, vector<1x8x128xf32>
    %114 = vector.shape_cast %113 : vector<1x8x128xf32> to vector<8x128xf32>
    %115 = vector.shape_cast %112 : vector<8x128xf32> to vector<1x8x128xf32>
    tpu.vector_store %arg7[%c0_38, %c0_39, %c0_40], %115 {strides = array<i32>} : memref<1x8x128xf32, #tpu.memory_space<vmem>>, vector<1x8x128xf32>,
    return
  }
  func.func @transform_0(%arg0: i32, %arg1: i32) -> (i32, i32) {
    %c0_i32 = arith.constant 0 : i32
    %c0_i32_0 = arith.constant 0 : i32
    return %c0_i32, %arg0 : i32, i32
  }
  func.func @transform_1(%arg0: i32, %arg1: i32) -> (i32, i32, i32) {
    %c0_i32 = arith.constant 0 : i32
    %c0_i32_0 = arith.constant 0 : i32
    %c0_i32_1 = arith.constant 0 : i32
    return %arg1, %c0_i32, %c0_i32_0 : i32, i32, i32
  }
  func.func @transform_2(%arg0: i32, %arg1: i32) -> (i32, i32, i32) {
    %c0_i32 = arith.constant 0 : i32
    %c0_i32_0 = arith.constant 0 : i32
    %c0_i32_1 = arith.constant 0 : i32
    return %arg1, %c0_i32, %c0_i32_0 : i32, i32, i32
  }
  func.func @transform_3(%arg0: i32, %arg1: i32) -> (i32, i32) {
    %c0_i32 = arith.constant 0 : i32
    %c0_i32_0 = arith.constant 0 : i32
    %c0_i32_1 = arith.constant 0 : i32
    return %c0_i32, %c0_i32_0 : i32, i32
  }
  func.func @transform_4(%arg0: i32, %arg1: i32) -> (i32, i32, i32) {
    %c0_i32 = arith.constant 0 : i32
    %c0_i32_0 = arith.constant 0 : i32
    return %arg1, %c0_i32, %arg0 : i32, i32, i32
  }
  func.func @transform_5(%arg0: i32, %arg1: i32) -> (i32, i32, i32) {
    %c0_i32 = arith.constant 0 : i32
    %c0_i32_0 = arith.constant 0 : i32
    return %arg1, %c0_i32, %arg0 : i32, i32, i32
  }
}

</mosaic_0001>

<llo_original>
// kernel: tpu_custom_call.1
$region0: #{tpu_custom_call.1}
  #allocation0 [shape = 'u32[]', space=smem, size = 0x4, offset = 0x4, fixed_abs, tag = 'smem constant byte address 0x4 - core index']
  #allocation1 [shape = 'u32[144,128]{1,0:T(1,128)}', space=vmem, size = 0x12000, scoped, tag = 'internal scratch']
  %s0 = inlined_call_operand.hbm [shape: f32[16,256], index: 0, kind: input, shape index: {}]
  %s1 = inlined_call_operand.hbm [shape: f32[2,8,8], index: 1, kind: input, shape index: {}]
  %s2 = inlined_call_operand.hbm [shape: f32[2,8,8], index: 2, kind: input, shape index: {}]
  %s3 = inlined_call_operand.hbm [shape: f32[8,8], index: 3, kind: input, shape index: {}]
  %s4 = inlined_call_operand.vmem [shape: f32[2,6,256], index: 4, kind: output, shape index: {0}]
  %s5 = inlined_call_operand.hbm [shape: f32[2,8,128], index: 5, kind: output, shape index: {1}]
  %6 = xla_tuple %s4, %s5
  %s7 = sld [smem:[#allocation0]]
  $region73: #{tpu_custom_call.1} parent=0
    _
  %s9 = ssub.s32 1, %s7
  %s10 = scalar_select 0, %s9, %s7
  $region1: #{tpu_custom_call.1} parent=0
    #allocation2 [shape = 'u8[16384]{0}', space=vmem, size = 0x4000, scoped, tag = 'input window, operand 0, single buffered']
    #allocation3 [shape = 's32[2]{0}', space=sflag, size = 0x8, scoped, tag = 'scoped memory for tpu_custom_call.1']
    #allocation4 [shape = 's32[2]{0}', space=sflag, size = 0x8, scoped, tag = 'scoped memory for tpu_custom_call.1']
    #allocation5 [shape = 'u8[8192]{0}', space=vmem, size = 0x2000, scoped, tag = 'input window, operand 1']
    #allocation6 [shape = 's32[2]{0}', space=sflag, size = 0x8, scoped, tag = 'scoped memory for tpu_custom_call.1']
    #allocation7 [shape = 'u8[8192]{0}', space=vmem, size = 0x2000, scoped, tag = 'input window, operand 2']
    #allocation8 [shape = 'u8[4096]{0}', space=vmem, size = 0x1000, scoped, tag = 'input window, operand 3, single buffered']
    #allocation9 [shape = 's32[1]{0}', space=sflag, size = 0x4, scoped, tag = 'scoped memory for tpu_custom_call.1']
    #allocation10 [shape = 'u8[8192]{0}', space=vmem, size = 0x2000, scoped, tag = 'output window, operand 1']
    %11 = vsyncpa [#allocation3], 0
    %12 = vsyncpa [#allocation6], 0
    %s13 = scalar_lea.sflag [#allocation6], 1
    %14 = vsyncpa %s13, 0
    %15 = vsyncpa [#allocation9], 0
    %16 = vsyncpa [#allocation4], 0
    %s17 = scalar_lea.sflag [#allocation4], 1
    %18 = vsyncpa %s17, 0
    loop: start=0, step=1, limit=4
    $region2: #{tpu_custom_call.1} parent=1 // loop_pre_header
      _
    $region3: #{tpu_custom_call.1} parent=1 // loop_header
      %s20 = sphi 0, %s24
      %p21 = scmp.ge.s32.totalorder %s20, 4
      %s27 = sphi 0, %s39
      %s28 = sphi 0, %s35
      %s29 = sphi 0, %s27
      %s30 = sphi 0, %s28
      %s31 = sphi 0, %s29
      %s32 = sphi 0, %s30
      %s42 = sphi 0, %s44
      %s45 = sphi 0, %s42
      %s46 = sphi 0, %s45
      %s62 = sphi 0, %s46
      %s68 = sphi 0, %s70
      %s71 = sphi 0, %s68
      %s72 = sphi 0, %s71
      %s88 = sphi 0, %s72
      %s94 = sphi 0, %s96
      %s97 = sphi 0, %s94
      %s98 = sphi 0, %s97
      %s114 = sphi 0, %s98
      %s118 = sphi 0, %s118
      %s120 = sphi 0, %s118
      %s121 = sphi 0, %s120
      %s135 = sphi 0, %s121
      %s143 = sphi 0, %s145
      %s146 = sphi 0, %s143
      %s147 = sphi 0, %s146
      %s163 = sphi 0, %s147
      %s171 = sphi 0, %s173
      %s174 = sphi 0, %s171
      %s175 = sphi 0, %s174
      %s191 = sphi 0, %s175
    $region4: #{tpu_custom_call.1} parent=1 // loop_header_branch
      %23 = sbr.rel (%p21) target = $region8
    $region5: #{tpu_custom_call.1} parent=1 // loop_body
      %s25 = ssub.s32 %s20, 1
      %s26 = ssub.s32 %s20, 2
      %s33 = sadd.s32 1, %s28
      %p34 = scmp.ge.s32.totalorder %s33, 2
      %s35 = scalar_select %p34, 0, %s33
      %s36 = sadd.s32 1, %s27
      %s37 = scalar_select %p34, %s36, %s27
      %p38 = scmp.ge.s32.totalorder %s37, 1
      %s39 = scalar_select %p38, 0, %s37
      %s40 = ssub.s32 %s27, %s39
      %p41 = scmp.eq.s32.totalorder %s40, 0
      %s43 = sadd.s32 %s42, 1
      %s44 = scalar_select %p41, %s42, %s43
      %p47 = pneg %p41
      %p48 = scmp.eq.s32.totalorder %s20, 1
      %p49 = por %p47, %p48
      %p50 = scmp.ne.s32.totalorder %s42, %s45
      %p51 = scmp.eq.s32.totalorder %s20, 0
      %p52 = por %p50, %p51
      %p53 = scmp.ne.s32.totalorder %s42, %s45
      %p54 = scmp.eq.s32.totalorder %s25, 1
      %p55 = por %p53, %p54
      %p56 = scmp.ne.s32.totalorder %s45, %s46
      %p57 = scmp.eq.s32.totalorder %s25, 0
      %p58 = por %p56, %p57
      %p59 = scmp.ne.s32.totalorder %s45, %s46
      %p60 = scmp.eq.s32.totalorder %s26, 1
      %p61 = por %p59, %p60
      %p63 = scmp.ne.s32.totalorder %s46, %s62
      %p64 = scmp.eq.s32.totalorder %s26, 0
      %p65 = por %p63, %p64
      %s66 = ssub.s32 %s28, %s35
      %p67 = scmp.eq.s32.totalorder %s66, 0
      %s69 = sadd.s32 %s68, 1
      %s70 = scalar_select %p67, %s68, %s69
      %p73 = pneg %p67
      %p74 = scmp.eq.s32.totalorder %s20, 1
      %p75 = por %p73, %p74
      %p76 = scmp.ne.s32.totalorder %s68, %s71
      %p77 = scmp.eq.s32.totalorder %s20, 0
      %p78 = por %p76, %p77
      %p79 = scmp.ne.s32.totalorder %s68, %s71
      %p80 = scmp.eq.s32.totalorder %s25, 1
      %p81 = por %p79, %p80
      %p82 = scmp.ne.s32.totalorder %s71, %s72
      %p83 = scmp.eq.s32.totalorder %s25, 0
      %p84 = por %p82, %p83
      %p85 = scmp.ne.s32.totalorder %s71, %s72
      %p86 = scmp.eq.s32.totalorder %s26, 1
      %p87 = por %p85, %p86
      %p89 = scmp.ne.s32.totalorder %s72, %s88
      %p90 = scmp.eq.s32.totalorder %s26, 0
      %p91 = por %p89, %p90
      %s92 = ssub.s32 %s28, %s35
      %p93 = scmp.eq.s32.totalorder %s92, 0
      %s95 = sadd.s32 %s94, 1
      %s96 = scalar_select %p93, %s94, %s95
      %p99 = pneg %p93
      %p100 = scmp.eq.s32.totalorder %s20, 1
      %p101 = por %p99, %p100
      %p102 = scmp.ne.s32.totalorder %s94, %s97
      %p103 = scmp.eq.s32.totalorder %s20, 0
      %p104 = por %p102, %p103
      %p105 = scmp.ne.s32.totalorder %s94, %s97
      %p106 = scmp.eq.s32.totalorder %s25, 1
      %p107 = por %p105, %p106
      %p108 = scmp.ne.s32.totalorder %s97, %s98
      %p109 = scmp.eq.s32.totalorder %s25, 0
      %p110 = por %p108, %p109
      %p111 = scmp.ne.s32.totalorder %s97, %s98
      %p112 = scmp.eq.s32.totalorder %s26, 1
      %p113 = por %p111, %p112
      %p115 = scmp.ne.s32.totalorder %s98, %s114
      %p116 = scmp.eq.s32.totalorder %s26, 0
      %p117 = por %p115, %p116
      %s119 = sadd.s32 %s118, 1
      %p122 = scmp.eq.s32.totalorder %s20, 1
      %p123 = scmp.ne.s32.totalorder %s118, %s120
      %p124 = scmp.eq.s32.totalorder %s20, 0
      %p125 = por %p123, %p124
      %p126 = scmp.ne.s32.totalorder %s118, %s120
      %p127 = scmp.eq.s32.totalorder %s25, 1
      %p128 = por %p126, %p127
      %p129 = scmp.ne.s32.totalorder %s120, %s121
      %p130 = scmp.eq.s32.totalorder %s25, 0
      %p131 = por %p129, %p130
      %p132 = scmp.ne.s32.totalorder %s120, %s121
      %p133 = scmp.eq.s32.totalorder %s26, 1
      %p134 = por %p132, %p133
      %p136 = scmp.ne.s32.totalorder %s121, %s135
      %p137 = scmp.eq.s32.totalorder %s26, 0
      %p138 = por %p136, %p137
      %s139 = ssub.s32 %s28, %s35
      %s140 = ssub.s32 %s27, %s39
      %s141 = sor.u32 %s139, %s140
      %p142 = scmp.eq.s32.totalorder %s141, 0
      %s144 = sadd.s32 %s143, 1
      %s145 = scalar_select %p142, %s143, %s144
      %p148 = pneg %p142
      %p149 = scmp.eq.s32.totalorder %s20, 1
      %p150 = por %p148, %p149
      %p151 = scmp.ne.s32.totalorder %s143, %s146
      %p152 = scmp.eq.s32.totalorder %s20, 0
      %p153 = por %p151, %p152
      %p154 = scmp.ne.s32.totalorder %s143, %s146
      %p155 = scmp.eq.s32.totalorder %s25, 1
      %p156 = por %p154, %p155
      %p157 = scmp.ne.s32.totalorder %s146, %s147
      %p158 = scmp.eq.s32.totalorder %s25, 0
      %p159 = por %p157, %p158
      %p160 = scmp.ne.s32.totalorder %s146, %s147
      %p161 = scmp.eq.s32.totalorder %s26, 1
      %p162 = por %p160, %p161
      %p164 = scmp.ne.s32.totalorder %s147, %s163
      %p165 = scmp.eq.s32.totalorder %s26, 0
      %p166 = por %p164, %p165
      %s167 = ssub.s32 %s28, %s35
      %s168 = ssub.s32 %s27, %s39
      %s169 = sor.u32 %s167, %s168
      %p170 = scmp.eq.s32.totalorder %s169, 0
      %s172 = sadd.s32 %s171, 1
      %s173 = scalar_select %p170, %s171, %s172
      %p176 = pneg %p170
      %p177 = scmp.eq.s32.totalorder %s20, 1
      %p178 = por %p176, %p177
      %p179 = scmp.ne.s32.totalorder %s171, %s174
      %p180 = scmp.eq.s32.totalorder %s20, 0
      %p181 = por %p179, %p180
      %p182 = scmp.ne.s32.totalorder %s171, %s174
      %p183 = scmp.eq.s32.totalorder %s25, 1
      %p184 = por %p182, %p183
      %p185 = scmp.ne.s32.totalorder %s174, %s175
      %p186 = scmp.eq.s32.totalorder %s25, 0
      %p187 = por %p185, %p186
      %p188 = scmp.ne.s32.totalorder %s174, %s175
      %p189 = scmp.eq.s32.totalorder %s26, 1
      %p190 = por %p188, %p189
      %p192 = scmp.ne.s32.totalorder %s175, %s191
      %p193 = scmp.eq.s32.totalorder %s26, 0
      %p194 = por %p192, %p193
      %p195 = scmp.le.s32.totalorder 1, %s20
      %p196 = scmp.lt.s32.totalorder %s20, 3
      %p197 = pnand %p195, %p196
      %p198 = pneg %p197
      // Predicated region
      $region9: #{tpu_custom_call.1} parent=5 // pred_check
        _
      $region10: #{tpu_custom_call.1} parent=5 // pred_check_branch
        %200 = sbr.rel (%p197) target = $region12
      $region11: #{tpu_custom_call.1} parent=5 // pred_region
        %s201 = ssub.s32 %s20, 1
        // Predicated region
        $region13: #{tpu_custom_call.1} parent=11 // pred_check
          %p202 = pneg %p58
        $region14: #{tpu_custom_call.1} parent=11 // pred_check_branch
          %204 = sbr.rel (%p202) target = $region16
        $region15: #{tpu_custom_call.1} parent=11 // pred_region
          %s205 = smul.u32 2, %s29
          %s207 = ssub.s32 512, 512
          %208 = vsyncadd [#allocation3], %s207
          %s209 = smul.addr %s205, 128
          %s210 = scalar_lea.hbm %s0, %s209
          %s211 = sshll.u32 [#allocation2], 4
          %s212 = int_to_ptr.vmem [resolvable:$true] %s211
          %217 = dma.hbm_to_vmem [thread:$0]  %s210, 512, %s212, [#allocation3], 256, 256, 16
        $region16: #{tpu_custom_call.1} parent=11 // pred_fallthru
          _
        // Predicated region
        $region17: #{tpu_custom_call.1} parent=11 // pred_check
          %p218 = pneg %p131
        $region18: #{tpu_custom_call.1} parent=11 // pred_check_branch
          %220 = sbr.rel (%p218) target = $region20
        $region19: #{tpu_custom_call.1} parent=11 // pred_region
          %s222 = ssub.s32 128, 128
          %223 = vsyncadd [#allocation9], %s222
          %s225 = sshll.u32 [#allocation8], 4
          %s226 = int_to_ptr.vmem [resolvable:$true] %s225
          %228 = dma.hbm_to_vmem [thread:$0]  %s3, 128, %s226, [#allocation9]
        $region20: #{tpu_custom_call.1} parent=11 // pred_fallthru
          _
      $region12: #{tpu_custom_call.1} parent=5 // pred_fallthru
        _
      %p229 = scmp.lt.s32.totalorder %s20, 2
      // Predicated region
      $region21: #{tpu_custom_call.1} parent=5 // pred_check
        %p230 = pneg %p229
      $region22: #{tpu_custom_call.1} parent=5 // pred_check_branch
        %232 = sbr.rel (%p230) target = $region24
      $region23: #{tpu_custom_call.1} parent=5 // pred_region
        // Predicated region
        $region25: #{tpu_custom_call.1} parent=23 // pred_check
          %p233 = pneg %p78
        $region26: #{tpu_custom_call.1} parent=23 // pred_check_branch
          %235 = sbr.rel (%p233) target = $region28
        $region27: #{tpu_custom_call.1} parent=23 // pred_region
          %s236 = sand.u32 %s20, 1
          %s237 = scalar_lea.sflag [#allocation6], %s236
          %s238 = sand.u32 %s68, 1
          %s239 = smul.addr %s238, 8
          %s240 = scalar_lea.vmem [#allocation5], %s239
          %s242 = ssub.s32 128, 128
          %243 = vsyncadd %s237, %s242
          %s244 = smul.addr %s28, 128
          %s245 = scalar_lea.hbm %s1, %s244
          %s247 = sshll.u32 %s240, 4
          %s248 = int_to_ptr.vmem [resolvable:$true] %s247
          %250 = dma.hbm_to_vmem [thread:$0]  %s245, 128, %s248, %s237
        $region28: #{tpu_custom_call.1} parent=23 // pred_fallthru
          _
        // Predicated region
        $region29: #{tpu_custom_call.1} parent=23 // pred_check
          %p251 = pneg %p104
        $region30: #{tpu_custom_call.1} parent=23 // pred_check_branch
          %253 = sbr.rel (%p251) target = $region32
        $region31: #{tpu_custom_call.1} parent=23 // pred_region
          %s254 = sand.u32 %s20, 1
          %s255 = scalar_lea.sflag [#allocation6], %s254
          %s256 = sand.u32 %s94, 1
          %s257 = smul.addr %s256, 8
          %s258 = scalar_lea.vmem [#allocation7], %s257
          %s260 = ssub.s32 128, 128
          %261 = vsyncadd %s255, %s260
          %s262 = smul.addr %s28, 128
          %s263 = scalar_lea.hbm %s2, %s262
          %s265 = sshll.u32 %s258, 4
          %s266 = int_to_ptr.vmem [resolvable:$true] %s265
          %268 = dma.hbm_to_vmem [thread:$0]  %s263, 128, %s266, %s255
        $region32: #{tpu_custom_call.1} parent=23 // pred_fallthru
          _
      $region24: #{tpu_custom_call.1} parent=5 // pred_fallthru
        _
      %p269 = scmp.le.s32.totalorder 1, %s20
      %p270 = scmp.lt.s32.totalorder %s20, 3
      %p271 = pnand %p269, %p270
      %p272 = pneg %p271
      // Predicated region
      $region33: #{tpu_custom_call.1} parent=5 // pred_check
        _
      $region34: #{tpu_custom_call.1} parent=5 // pred_check_branch
        %274 = sbr.rel (%p271) target = $region36
      $region35: #{tpu_custom_call.1} parent=5 // pred_region
        %s275 = ssub.s32 %s20, 1
        // Predicated region
        $region37: #{tpu_custom_call.1} parent=35 // pred_check
          %p276 = pneg %p58
        $region38: #{tpu_custom_call.1} parent=35 // pred_check_branch
          %278 = sbr.rel (%p276) target = $region40
        $region39: #{tpu_custom_call.1} parent=35 // pred_region
          %279 = dma.done [#allocation3], 512
        $region40: #{tpu_custom_call.1} parent=35 // pred_fallthru
          _
        %s280 = sand.u32 %s25, 1
        %s281 = scalar_lea.sflag [#allocation6], %s280
        %s282 = sand.u32 %s71, 1
        %s283 = smul.addr %s282, 8
        %s284 = scalar_lea.vmem [#allocation5], %s283
        // Predicated region
        $region41: #{tpu_custom_call.1} parent=35 // pred_check
          %p285 = pneg %p84
        $region42: #{tpu_custom_call.1} parent=35 // pred_check_branch
          %287 = sbr.rel (%p285) target = $region44
        $region43: #{tpu_custom_call.1} parent=35 // pred_region
          %288 = dma.done %s281, 128
        $region44: #{tpu_custom_call.1} parent=35 // pred_fallthru
          _
        %s289 = sand.u32 %s25, 1
        %s290 = scalar_lea.sflag [#allocation6], %s289
        %s291 = sand.u32 %s97, 1
        %s292 = smul.addr %s291, 8
        %s293 = scalar_lea.vmem [#allocation7], %s292
        // Predicated region
        $region45: #{tpu_custom_call.1} parent=35 // pred_check
          %p294 = pneg %p110
        $region46: #{tpu_custom_call.1} parent=35 // pred_check_branch
          %296 = sbr.rel (%p294) target = $region48
        $region47: #{tpu_custom_call.1} parent=35 // pred_region
          %297 = dma.done %s290, 128
        $region48: #{tpu_custom_call.1} parent=35 // pred_fallthru
          _
        // Predicated region
        $region49: #{tpu_custom_call.1} parent=35 // pred_check
          %p298 = pneg %p131
        $region50: #{tpu_custom_call.1} parent=35 // pred_check_branch
          %300 = sbr.rel (%p298) target = $region52
        $region51: #{tpu_custom_call.1} parent=35 // pred_region
          %301 = dma.done [#allocation9], 128
        $region52: #{tpu_custom_call.1} parent=35 // pred_fallthru
          _
        %p302 = pneg %p58
        %p303 = pneg %p55
        %s304 = sand.u32 %s25, 1
        %s305 = scalar_lea.sflag [#allocation6], %s304
        %s306 = sand.u32 %s71, 1
        %s307 = smul.addr %s306, 8
        %s308 = scalar_lea.vmem [#allocation5], %s307
        %p309 = pneg %p84
        %p310 = pneg %p81
        %s311 = sand.u32 %s25, 1
        %s312 = scalar_lea.sflag [#allocation6], %s311
        %s313 = sand.u32 %s97, 1
        %s314 = smul.addr %s313, 8
        %s315 = scalar_lea.vmem [#allocation7], %s314
        %p316 = pneg %p110
        %p317 = pneg %p107
        %p318 = pneg %p131
        %p319 = pneg %p128
        %p320 = pneg %p159
        %p321 = pneg %p156
        %s322 = smul.u32 2, %s29
        %p323 = scmp.lt.s32.totalorder %s30, 1
        %s324 = scalar_select %p323, %s30, 1
        %p325 = scmp.lt.s32.totalorder %s322, 1
        %s326 = scalar_select %p325, %s322, 1
        %s327 = smul.addr %s324, 2
        %s328 = sadd.s32 %s326, %s327
        %s329 = smul.addr %s328, 8
        %s330 = scalar_lea.vmem %s4, %s329
        %p331 = pneg %p187
        %p332 = pneg %p184
        %s333 = sand.u32 %s174, 1
        %s334 = scalar_lea.sflag [#allocation4], %s333
        %s335 = sand.u32 %s174, 1
        %s336 = smul.addr %s335, 8
        %s337 = scalar_lea.vmem [#allocation10], %s336
        %s338 = smul.u32 2, %s29
        %s339 = smul.u32 2, %s29
        %p340 = scmp.lt.s32.totalorder %s30, 1
        %s341 = scalar_select %p340, %s30, 1
        %p342 = scmp.lt.s32.totalorder %s339, 1
        %s343 = scalar_select %p342, %s339, 1
        %s344 = smul.addr %s341, 2
        %s345 = sadd.s32 %s343, %s344
        %s346 = smul.addr %s345, 8
        %s347 = scalar_lea.vmem %s4, %s346
        %s348 = smul.u32 2, %s29
        %v349 = vld [vmem:[#allocation2] ss:$8 sm:$0x3]
        %s350 = scalar_lea.vmem [#allocation2], 1
        %v351 = vld [vmem:[%s350] ss:$8 sm:$0x3]
        %s352 = scalar_lea.vmem [#allocation2], 2
        %v353 = vld [vmem:[%s352] ss:$8 sm:$0x3]
        %s354 = scalar_lea.vmem [#allocation2], 3
        %v355 = vld [vmem:[%s354] ss:$8 sm:$0x3]
        %s356 = scalar_lea.vmem [#allocation2], 4
        %v357 = vld [vmem:[%s356] ss:$8 sm:$0x3]
        %s358 = scalar_lea.vmem [#allocation2], 5
        %v359 = vld [vmem:[%s358] ss:$8 sm:$0x3]
        %s360 = scalar_lea.vmem [#allocation2], 6
        %v361 = vld [vmem:[%s360] ss:$8 sm:$0x3]
        %s362 = scalar_lea.vmem [#allocation2], 7
        %v363 = vld [vmem:[%s362] ss:$8 sm:$0x3]
        %s364 = scalar_lea.vmem [#allocation2], 16
        %v365 = vld [vmem:[%s364] ss:$8 sm:$0x3]
        %s366 = scalar_lea.vmem [#allocation2], 17
        %v367 = vld [vmem:[%s366] ss:$8 sm:$0x3]
        %s368 = scalar_lea.vmem [#allocation2], 18
        %v369 = vld [vmem:[%s368] ss:$8 sm:$0x3]
        %s370 = scalar_lea.vmem [#allocation2], 19
        %v371 = vld [vmem:[%s370] ss:$8 sm:$0x3]
        %v372 = vld [vmem:[%s284] sm:$0xff]
        %v374 = vlaneseq
        %v375 = vshrl.u32 %v374, 7
        %v376 = vsub.s32 0, %v375
        %v377 = vrot.slane %v353, %v376
        %v378 = vlaneseq
        %v379 = vshrl.u32 %v378, 7
        %v380 = vsub.s32 1, %v379
        %v381 = vrot.slane %v353, %v380
        %385 = vset.pattern.permute.xlu0 2
        %386 = vperm.xlu0 %385, %v372
        %v387 = vpop.permute.xlu0 %386
        %v389 = vmin.f32 %v377, %v387
        %v390 = vmin.f32 %v381, %v387
        %v392 = vlaneseq
        %v393 = vshrl.u32 %v392, 7
        %v394 = vsub.s32 0, %v393
        %v395 = vrot.slane %v349, %v394
        %v396 = vlaneseq
        %v397 = vshrl.u32 %v396, 7
        %v398 = vsub.s32 1, %v397
        %v399 = vrot.slane %v349, %v398
        %402 = vset.pattern.permute.xlu0 0
        %403 = vperm.xlu0 %402, %v372
        %v404 = vpop.permute.xlu0 %403
        %v406 = vmax.f32 %v395, %v404
        %v407 = vmax.f32 %v399, %v404
        %v408 = vsub.f32 %v389, %v406
        %v409 = vsub.f32 %v390, %v407
        %v410 = vadd.f32 %v408, 1.0
        %v411 = vadd.f32 %v409, 1.0
        %v412 = vmax.f32 %v410, 0.0
        %v413 = vmax.f32 %v411, 0.0
        %v415 = vlaneseq
        %v416 = vshrl.u32 %v415, 7
        %v417 = vsub.s32 0, %v416
        %v418 = vrot.slane %v355, %v417
        %v419 = vlaneseq
        %v420 = vshrl.u32 %v419, 7
        %v421 = vsub.s32 1, %v420
        %v422 = vrot.slane %v355, %v421
        %425 = vset.pattern.permute.xlu0 3
        %426 = vperm.xlu0 %425, %v372
        %v427 = vpop.permute.xlu0 %426
        %v429 = vmin.f32 %v418, %v427
        %v430 = vmin.f32 %v422, %v427
        %v432 = vlaneseq
        %v433 = vshrl.u32 %v432, 7
        %v434 = vsub.s32 0, %v433
        %v435 = vrot.slane %v351, %v434
        %v436 = vlaneseq
        %v437 = vshrl.u32 %v436, 7
        %v438 = vsub.s32 1, %v437
        %v439 = vrot.slane %v351, %v438
        %442 = vset.pattern.permute.xlu0 1
        %443 = vperm.xlu0 %442, %v372
        %v444 = vpop.permute.xlu0 %443
        %v446 = vmax.f32 %v435, %v444
        %v447 = vmax.f32 %v439, %v444
        %v448 = vsub.f32 %v429, %v446
        %v449 = vsub.f32 %v430, %v447
        %v450 = vadd.f32 %v448, 1.0
        %v451 = vadd.f32 %v449, 1.0
        %v452 = vmax.f32 %v450, 0.0
        %v453 = vmax.f32 %v451, 0.0
        %v454 = vmul.f32 %v412, %v452
        %v455 = vmul.f32 %v413, %v453
        %v457 = vlaneseq
        %v458 = vshrl.u32 %v457, 7
        %v459 = vsub.s32 0, %v458
        %v460 = vrot.slane %v357, %v459
        %v461 = vlaneseq
        %v462 = vshrl.u32 %v461, 7
        %v463 = vsub.s32 1, %v462
        %v464 = vrot.slane %v357, %v463
        %467 = vset.pattern.permute.xlu0 4
        %468 = vperm.xlu0 %467, %v372
        %v469 = vpop.permute.xlu0 %468
        %v471 = vadd.f32 %v460, %v469
        %v472 = vadd.f32 %v464, %v469
        %v473 = vsub.f32 %v471, %v454
        %v474 = vsub.f32 %v472, %v455
        %v475 = vrcp.pop %v473
        %v476 = vmul.f32 %v454, %v475
        %v477 = vrcp.pop %v474
        %v478 = vmul.f32 %v455, %v477
        %v479 = vrot.slane %v476, 4
        %v480 = vmax.f32 %v476, %v479
        %v481 = vrot.slane %v480, 2
        %v482 = vmax.f32 %v480, %v481
        %v483 = vrot.slane %v482, 1
        %v484 = vmax.f32 %v482, %v483
        %v485 = vrot.slane %v478, 4
        %v486 = vmax.f32 %v478, %v485
        %v487 = vrot.slane %v486, 2
        %v488 = vmax.f32 %v486, %v487
        %v489 = vrot.slane %v488, 1
        %v490 = vmax.f32 %v488, %v489
        %v491 = vlaneseq
        %v492 = vshrl.u32 %v491, 7
        %vm493 = vcmp.eq.f32.partialorder %v476, %v484
        %vm494 = vcmp.eq.f32.partialorder %v478, %v490
        %v495 = vsel %vm493, %v492, 8
        %v496 = vsel %vm494, %v492, 8
        %v497 = vrot.slane %v495, 4
        %vm498 = vcmp.lt.s32.totalorder %v495, %v497
        %v499 = vsel %vm498, %v495, %v497
        %v500 = vrot.slane %v499, 2
        %vm501 = vcmp.lt.s32.totalorder %v499, %v500
        %v502 = vsel %vm501, %v499, %v500
        %v503 = vrot.slane %v502, 1
        %vm504 = vcmp.lt.s32.totalorder %v502, %v503
        %v505 = vsel %vm504, %v502, %v503
        %v506 = vrot.slane %v496, 4
        %vm507 = vcmp.lt.s32.totalorder %v496, %v506
        %v508 = vsel %vm507, %v496, %v506
        %v509 = vrot.slane %v508, 2
        %vm510 = vcmp.lt.s32.totalorder %v508, %v509
        %v511 = vsel %vm510, %v508, %v509
        %v512 = vrot.slane %v511, 1
        %vm513 = vcmp.lt.s32.totalorder %v511, %v512
        %v514 = vsel %vm513, %v511, %v512
        %v515 = vmax.f32 %v476, %v478
        %516 = vmax.xlane.f32.xlu0 %v515
        %v517 = vpop.xlane.xlu0 %516
        %vm518 = vcmp.eq.f32.partialorder %v476, %v517
        %vm519 = vcmp.eq.f32.partialorder %v478, %v517
        %v520 = vsel %vm518, 1, 0
        %v521 = vsel %vm519, 1, 0
        %v522 = vcvt.s32.f32 %v520
        %v523 = vcvt.s32.f32 %v521
        %v524 = vld [vmem:[#allocation8] sm:$0xff]
        %vm525 = vcmask 64512
        %v527 = vsel %vm525, %v524, 0
        %529 = vmatprep.subr.mxu0 0.0
        %530 = vmatpush1.msra.mxu0 0.0
        %531 = vmatprep.subr.mxu0 0.0
        %532 = vmatpush1.msra.mxu0 0.0
        %533 = vmatprep.subr.mxu0 0.0
        %534 = vmatpush1.msra.mxu0 0.0
        %535 = vmatprep.subr.mxu0 0.0
        %536 = vmatpush1.msra.mxu0 0.0
        %537 = vmatprep.subr.mxu0 0.0
        %538 = vmatpush1.msra.mxu0 0.0
        %539 = vmatprep.subr.mxu0 0.0
        %540 = vmatpush1.msra.mxu0 0.0
        %541 = vmatprep.subr.mxu0 0.0
        %542 = vmatpush1.msra.mxu0 0.0
        %543 = vmatprep.subr.mxu0 0.0
        %544 = vmatpush1.msra.mxu0 0.0
        %545 = vmatprep.subr.mxu0 0.0
        %546 = vmatpush1.msra.mxu0 0.0
        %547 = vmatprep.subr.mxu0 0.0
        %548 = vmatpush1.msra.mxu0 0.0
        %549 = vmatprep.subr.mxu0 0.0
        %550 = vmatpush1.msra.mxu0 0.0
        %551 = vmatprep.subr.mxu0 0.0
        %552 = vmatpush1.msra.mxu0 0.0
        %553 = vmatprep.subr.mxu0 0.0
        %554 = vmatpush1.msra.mxu0 0.0
        %555 = vmatprep.subr.mxu0 0.0
        %556 = vmatpush1.msra.mxu0 0.0
        %557 = vmatprep.subr.mxu0 0.0
        %558 = vmatpush1.msra.mxu0 0.0
        %559 = vmatprep.subr.mxu0 %v523
        %560 = vmatpush1.msra.mxu0 %v522
        %561 = vmatprep.subr.mxu0 0.0
        %562 = vmatpush2.msra.mxu0 0.0
        %563 = vmatprep.subr.mxu0 0.0
        %564 = vmatpush2.msra.mxu0 0.0
        %565 = vmatprep.subr.mxu0 0.0
        %566 = vmatpush2.msra.mxu0 0.0
        %567 = vmatprep.subr.mxu0 0.0
        %568 = vmatpush2.msra.mxu0 0.0
        %569 = vmatprep.subr.mxu0 0.0
        %570 = vmatpush2.msra.mxu0 0.0
        %571 = vmatprep.subr.mxu0 0.0
        %572 = vmatpush2.msra.mxu0 0.0
        %573 = vmatprep.subr.mxu0 0.0
        %574 = vmatpush2.msra.mxu0 0.0
        %575 = vmatprep.subr.mxu0 0.0
        %576 = vmatpush2.msra.mxu0 0.0
        %577 = vmatprep.subr.mxu0 0.0
        %578 = vmatpush2.msra.mxu0 0.0
        %579 = vmatprep.subr.mxu0 0.0
        %580 = vmatpush2.msra.mxu0 0.0
        %581 = vmatprep.subr.mxu0 0.0
        %582 = vmatpush2.msra.mxu0 0.0
        %583 = vmatprep.subr.mxu0 0.0
        %584 = vmatpush2.msra.mxu0 0.0
        %585 = vmatprep.subr.mxu0 0.0
        %586 = vmatpush2.msra.mxu0 0.0
        %587 = vmatprep.subr.mxu0 0.0
        %588 = vmatpush2.msra.mxu0 0.0
        %589 = vmatprep.subr.mxu0 0.0
        %590 = vmatpush2.msra.mxu0 0.0
        %591 = vmatprep.subr.mxu0 0.0
        %592 = vmatpush2.msra.mxu0 0.0
        %593 = vmatprep.mubr.f32.mxu0 0.0
        %594 = vmatmul.mubr.f32.gmra.mxu0 %v527
        %v595 = vpop.f32.mrf.mxu0
        %v596 = vadd.f32 0.0, %v595
        %v597 = vpop.f32.mrf.mxu0
        %v598 = vadd.f32 0.0, %v597
        %599 = vdwg.mxu0
        %vm600 = vcmp.lt.f32.partialorder %v484, 0.3
        %vm601 = vcmp.lt.f32.partialorder %v490, 0.3
        %v602 = vsel %vm600, 0.0, -1.0
        %v603 = vsel %vm601, 0.0, -1.0
        %vm604 = vcmp.ge.f32.partialorder %v484, 0.7
        %vm605 = vcmp.ge.f32.partialorder %v490, 0.7
        %v606 = vsel %vm604, 1.0, %v602
        %v607 = vsel %vm605, 1.0, %v603
        %vm608 = vcmp.gt.f32.partialorder %v359, 0.5
        %v611 = vcombine.low %v606, %v607
        %v613 = vunpack.c.l.s4 1966171168
        %v614 = vunpack.c.0.s8 %v613
        %v615 = vlaneseq
        %v616 = vshrl.u32 %v615, 7
        %v617 = vsub.s32 %v614, %v616
        %v618 = vrot.slane %v611, %v617
        %v620 = vunpack.c.l.s4 1966171168
        %v621 = vunpack.c.0.s8 %v620
        %v622 = vlaneseq
        %v623 = vshrl.u32 %v622, 7
        %v624 = vsub.s32 %v621, %v623
        %v625 = vrot.slane %v618, %v624
        %v627 = vsel %vm608, %v625, -1.0
        %vm628 = vcmp.eq.s32.totalorder %v492, %v505
        %vm629 = vcmp.eq.s32.totalorder %v492, %v514
        %v630 = vsel %vm628, 1, 0
        %v631 = vsel %vm629, 1, 0
        %v632 = vcvt.s32.f32 %v630
        %v633 = vcvt.s32.f32 %v631
        %v634 = vld [vmem:[%s293] sm:$0xff]
        %v636 = vsel %vm525, %v634, 0
        %638 = vmatprep.subr.mxu0 0.0
        %639 = vmatpush1.msra.mxu0 0.0
        %640 = vmatprep.subr.mxu0 0.0
        %641 = vmatpush1.msra.mxu0 0.0
        %642 = vmatprep.subr.mxu0 0.0
        %643 = vmatpush1.msra.mxu0 0.0
        %644 = vmatprep.subr.mxu0 0.0
        %645 = vmatpush1.msra.mxu0 0.0
        %646 = vmatprep.subr.mxu0 0.0
        %647 = vmatpush1.msra.mxu0 0.0
        %648 = vmatprep.subr.mxu0 0.0
        %649 = vmatpush1.msra.mxu0 0.0
        %650 = vmatprep.subr.mxu0 0.0
        %651 = vmatpush1.msra.mxu0 0.0
        %652 = vmatprep.subr.mxu0 0.0
        %653 = vmatpush1.msra.mxu0 0.0
        %654 = vmatprep.subr.mxu0 0.0
        %655 = vmatpush1.msra.mxu0 0.0
        %656 = vmatprep.subr.mxu0 0.0
        %657 = vmatpush1.msra.mxu0 0.0
        %658 = vmatprep.subr.mxu0 0.0
        %659 = vmatpush1.msra.mxu0 0.0
        %660 = vmatprep.subr.mxu0 0.0
        %661 = vmatpush1.msra.mxu0 0.0
        %662 = vmatprep.subr.mxu0 0.0
        %663 = vmatpush1.msra.mxu0 0.0
        %664 = vmatprep.subr.mxu0 0.0
        %665 = vmatpush1.msra.mxu0 0.0
        %666 = vmatprep.subr.mxu0 0.0
        %667 = vmatpush1.msra.mxu0 0.0
        %668 = vmatprep.subr.mxu0 %v633
        %669 = vmatpush1.msra.mxu0 %v632
        %670 = vmatprep.subr.mxu0 0.0
        %671 = vmatpush2.msra.mxu0 0.0
        %672 = vmatprep.subr.mxu0 0.0
        %673 = vmatpush2.msra.mxu0 0.0
        %674 = vmatprep.subr.mxu0 0.0
        %675 = vmatpush2.msra.mxu0 0.0
        %676 = vmatprep.subr.mxu0 0.0
        %677 = vmatpush2.msra.mxu0 0.0
        %678 = vmatprep.subr.mxu0 0.0
        %679 = vmatpush2.msra.mxu0 0.0
        %680 = vmatprep.subr.mxu0 0.0
        %681 = vmatpush2.msra.mxu0 0.0
        %682 = vmatprep.subr.mxu0 0.0
        %683 = vmatpush2.msra.mxu0 0.0
        %684 = vmatprep.subr.mxu0 0.0
        %685 = vmatpush2.msra.mxu0 0.0
        %686 = vmatprep.subr.mxu0 0.0
        %687 = vmatpush2.msra.mxu0 0.0
        %688 = vmatprep.subr.mxu0 0.0
        %689 = vmatpush2.msra.mxu0 0.0
        %690 = vmatprep.subr.mxu0 0.0
        %691 = vmatpush2.msra.mxu0 0.0
        %692 = vmatprep.subr.mxu0 0.0
        %693 = vmatpush2.msra.mxu0 0.0
        %694 = vmatprep.subr.mxu0 0.0
        %695 = vmatpush2.msra.mxu0 0.0
        %696 = vmatprep.subr.mxu0 0.0
        %697 = vmatpush2.msra.mxu0 0.0
        %698 = vmatprep.subr.mxu0 0.0
        %699 = vmatpush2.msra.mxu0 0.0
        %700 = vmatprep.subr.mxu0 0.0
        %701 = vmatpush2.msra.mxu0 0.0
        %702 = vmatprep.mubr.f32.mxu0 0.0
        %703 = vmatmul.mubr.f32.gmra.mxu0 %v636
        %v704 = vpop.f32.mrf.mxu0
        %v705 = vadd.f32 0.0, %v704
        %v706 = vpop.f32.mrf.mxu0
        %v707 = vadd.f32 0.0, %v706
        %708 = vdwg.mxu0
        %v711 = vrot.slane %v705, 4
        %v712 = vrot.slane %v707, 4
        %v715 = vadd.f32 %v705, %v711
        %v716 = vadd.f32 %v707, %v712
        %v718 = vlaneseq
        %v719 = vshrl.u32 %v718, 7
        %v720 = vsub.s32 0, %v719
        %v721 = vrot.slane %v361, %v720
        %v722 = vlaneseq
        %v723 = vshrl.u32 %v722, 7
        %v724 = vsub.s32 1, %v723
        %v725 = vrot.slane %v361, %v724
        %v728 = vsub.f32 %v715, %v721
        %v729 = vsub.f32 %v716, %v725
        %v731 = vlaneseq
        %v732 = vshrl.u32 %v731, 7
        %v733 = vsub.s32 0, %v732
        %v734 = vrot.slane %v365, %v733
        %v735 = vlaneseq
        %v736 = vshrl.u32 %v735, 7
        %v737 = vsub.s32 1, %v736
        %v738 = vrot.slane %v365, %v737
        %v741 = vmul.f32 %v728, %v734
        %v742 = vmul.f32 %v729, %v738
        %v744 = vlaneseq
        %v745 = vshrl.u32 %v744, 7
        %v746 = vsub.s32 0, %v745
        %v747 = vrot.slane %v359, %v746
        %v748 = vlaneseq
        %v749 = vshrl.u32 %v748, 7
        %v750 = vsub.s32 1, %v749
        %v751 = vrot.slane %v359, %v750
        %v754 = vmul.f32 %v741, %v747
        %v755 = vmul.f32 %v742, %v751
        %v757 = vlaneseq
        %v758 = vshrl.u32 %v757, 7
        %v759 = vsub.s32 0, %v758
        %v760 = vrot.slane %v363, %v759
        %v761 = vlaneseq
        %v762 = vshrl.u32 %v761, 7
        %v763 = vsub.s32 1, %v762
        %v764 = vrot.slane %v363, %v763
        %v767 = vsub.f32 %v715, %v760
        %v768 = vsub.f32 %v716, %v764
        %v770 = vlaneseq
        %v771 = vshrl.u32 %v770, 7
        %v772 = vsub.s32 0, %v771
        %v773 = vrot.slane %v367, %v772
        %v774 = vlaneseq
        %v775 = vshrl.u32 %v774, 7
        %v776 = vsub.s32 1, %v775
        %v777 = vrot.slane %v367, %v776
        %v780 = vmul.f32 %v767, %v773
        %v781 = vmul.f32 %v768, %v777
        %v782 = vmul.f32 %v780, %v747
        %v783 = vmul.f32 %v781, %v751
        %v785 = vlaneseq
        %v786 = vshrl.u32 %v785, 7
        %v787 = vsub.s32 0, %v786
        %v788 = vrot.slane %v369, %v787
        %v789 = vlaneseq
        %v790 = vshrl.u32 %v789, 7
        %v791 = vsub.s32 1, %v790
        %v792 = vrot.slane %v369, %v791
        %v795 = vsub.f32 %v715, %v788
        %v796 = vsub.f32 %v716, %v792
        %v797 = vmul.f32 %v795, %v747
        %v798 = vmul.f32 %v796, %v751
        %v800 = vlaneseq
        %v801 = vshrl.u32 %v800, 7
        %v802 = vsub.s32 0, %v801
        %v803 = vrot.slane %v371, %v802
        %v804 = vlaneseq
        %v805 = vshrl.u32 %v804, 7
        %v806 = vsub.s32 1, %v805
        %v807 = vrot.slane %v371, %v806
        %v810 = vsub.f32 %v715, %v803
        %v811 = vsub.f32 %v716, %v807
        %v812 = vmul.f32 %v810, %v747
        %v813 = vmul.f32 %v811, %v751
        %v815 = vlaneseq
        %v816 = vshrl.u32 %v815, 7
        %v817 = vsub.s32 0, %v816
        %v818 = vrot.slane %v627, %v817
        %v819 = vlaneseq
        %v820 = vshrl.u32 %v819, 7
        %v821 = vsub.s32 1, %v820
        %v822 = vrot.slane %v627, %v821
        %v827 = vrot.slane %v754, 7
        %v828 = vrot.slane %v755, 7
        %v833 = vrot.slane %v782, 7
        %v834 = vrot.slane %v783, 7
        %v839 = vrot.slane %v797, 7
        %v840 = vrot.slane %v798, 7
        %v845 = vrot.slane %v812, 7
        %v846 = vrot.slane %v813, 7
        %v851 = vrot.slane %v596, 3
        %v852 = vrot.slane %v598, 3
        %vm855 = vcmask 1040384
        %v856 = vsel %vm855, %v818, %v827
        %v857 = vsel %vm855, %v822, %v828
        %vm858 = vcmask 1041408
        %v859 = vsel %vm858, %v856, %v833
        %v860 = vsel %vm858, %v857, %v834
        %vm861 = vcmask 1042432
        %v862 = vsel %vm861, %v859, %v839
        %v863 = vsel %vm861, %v860, %v840
        %vm864 = vcmask 1043456
        %v865 = vsel %vm864, %v862, %v845
        %v866 = vsel %vm864, %v863, %v846
        %vm867 = vcmask 1044480
        %v868 = vsel %vm867, %v865, %v851
        %v869 = vsel %vm867, %v866, %v852
        %870 = vst [vmem:[%s347] sm:$0x3f] %v868
        %871 = vst [vmem:[%s347 + $0x8] sm:$0x3f] %v869
        %872 = vst [vmem:[%s337] sm:$0xff] %v517
        %s873 = smul.u32 2, %s29
        %p874 = scmp.lt.s32.totalorder %s30, 1
        %s875 = scalar_select %p874, %s30, 1
        %p876 = scmp.lt.s32.totalorder %s873, 1
        %s877 = scalar_select %p876, %s873, 1
        %s878 = smul.addr %s875, 2
        %s879 = sadd.s32 %s877, %s878
        %s880 = smul.addr %s879, 8
        %s881 = scalar_lea.vmem %s4, %s880
        %s882 = sand.u32 %s174, 1
        %s883 = scalar_lea.sflag [#allocation4], %s882
        %s884 = sand.u32 %s174, 1
        %s885 = smul.addr %s884, 8
        %s886 = scalar_lea.vmem [#allocation10], %s885
        // Predicated region
        $region53: #{tpu_custom_call.1} parent=35 // pred_check
          %p887 = pneg %p156
        $region54: #{tpu_custom_call.1} parent=35 // pred_check_branch
          %889 = sbr.rel (%p887) target = $region56
        $region55: #{tpu_custom_call.1} parent=35 // pred_region
          %s890 = smul.u32 2, %s29
        $region56: #{tpu_custom_call.1} parent=35 // pred_fallthru
          _
        // Predicated region
        $region57: #{tpu_custom_call.1} parent=35 // pred_check
          %p891 = pneg %p184
        $region58: #{tpu_custom_call.1} parent=35 // pred_check_branch
          %893 = sbr.rel (%p891) target = $region60
        $region59: #{tpu_custom_call.1} parent=35 // pred_region
          %s895 = ssub.s32 128, 128
          %896 = vsyncadd %s883, %s895
          %s897 = sadd.s32 %s29, %s30
          %s898 = smul.addr %s897, 128
          %s899 = scalar_lea.hbm %s5, %s898
          %s901 = sshll.u32 %s886, 4
          %s902 = int_to_ptr.vmem [resolvable:$true] %s901
          %904 = dma.vmem_to_hbm [thread:$0]  %s902, 128, %s899, %s883
        $region60: #{tpu_custom_call.1} parent=35 // pred_fallthru
          _
      $region36: #{tpu_custom_call.1} parent=5 // pred_fallthru
        _
      %p905 = scmp.le.s32.totalorder 2, %s20
      // Predicated region
      $region61: #{tpu_custom_call.1} parent=5 // pred_check
        %p906 = pneg %p905
      $region62: #{tpu_custom_call.1} parent=5 // pred_check_branch
        %908 = sbr.rel (%p906) target = $region64
      $region63: #{tpu_custom_call.1} parent=5 // pred_region
        %s909 = ssub.s32 %s20, 2
        // Predicated region
        $region65: #{tpu_custom_call.1} parent=63 // pred_check
          %p910 = pneg %p162
        $region66: #{tpu_custom_call.1} parent=63 // pred_check_branch
          %912 = sbr.rel (%p910) target = $region68
        $region67: #{tpu_custom_call.1} parent=63 // pred_region
          %s913 = smul.u32 2, %s31
          %p914 = scmp.lt.s32.totalorder %s32, 1
          %s915 = scalar_select %p914, %s32, 1
          %p916 = scmp.lt.s32.totalorder %s913, 1
          %s917 = scalar_select %p916, %s913, 1
          %s918 = smul.addr %s915, 2
          %s919 = sadd.s32 %s917, %s918
          %s920 = smul.addr %s919, 8
          %s921 = scalar_lea.vmem %s4, %s920
        $region68: #{tpu_custom_call.1} parent=63 // pred_fallthru
          _
        // Predicated region
        $region69: #{tpu_custom_call.1} parent=63 // pred_check
          %p922 = pneg %p190
        $region70: #{tpu_custom_call.1} parent=63 // pred_check_branch
          %924 = sbr.rel (%p922) target = $region72
        $region71: #{tpu_custom_call.1} parent=63 // pred_region
          %s925 = sand.u32 %s175, 1
          %s926 = scalar_lea.sflag [#allocation4], %s925
          %s927 = sand.u32 %s175, 1
          %s928 = smul.addr %s927, 8
          %s929 = scalar_lea.vmem [#allocation10], %s928
          %930 = dma.done %s926, 128
        $region72: #{tpu_custom_call.1} parent=63 // pred_fallthru
          _
      $region64: #{tpu_custom_call.1} parent=5 // pred_fallthru
        _
    $region6: #{tpu_custom_call.1} parent=1 // loop_footer
      %s24 = sadd.s32 1, %s20
    $region7: #{tpu_custom_call.1} parent=1 // loop_footer_branch
      %19 = sbr.rel target = $region3
    $region8: #{tpu_custom_call.1} parent=1 // loop_exit
      _
    %931 = vsyncpa [#allocation3], 1
    %s932 = scalar_lea.sflag [#allocation3], 1
    %933 = vsyncpa %s932, 1
    %934 = vsyncpa [#allocation6], 1
    %s935 = scalar_lea.sflag [#allocation6], 1
    %936 = vsyncpa %s935, 1
    %937 = vsyncpa [#allocation9], 1
    %938 = vsyncpa [#allocation4], 1
    %s939 = scalar_lea.sflag [#allocation4], 1
    %940 = vsyncpa %s939, 1

</llo_original>
